<compile_context>
chip_gen: v7x
topology: tpu7x:2x2x1
jax: 0.10.0
libtpu: 0.0.40
codegen_flags: <defaults>
</compile_context>

<pallas_src>
import numpy as np
import jax
import jax.numpy as jnp
from jax.experimental import pallas as pl
from jax.experimental.pallas import tpu as pltpu

_TARGET_BLOCK_BYTES = 4 * 1024 * 1024      # ~4 MiB payload per grid step
_MIN_PALLAS_ROWS = 1024                    # below this, skip pallas (launch cost)
_VMEM_LIMIT_BYTES = 48 * 1024 * 1024       # fits v7x 64 MiB/TC with headroom


def _minv_matmul_kernel(x_ref, w_ref, o_ref):
    """out_block = x_block @ W'.

    x_ref : (tb, g*n*a)      grouped momenta block, caller dtype (no upcast copy)
    w_ref : (g*n*a, g*n*a)   dense block-diagonal Minv operator, loaded once
    o_ref : (tb, g*n*a)      output block, caller dtype
    """
    o_ref[...] = jnp.dot(
        x_ref[...], w_ref[...], preferred_element_type=jnp.float32
    ).astype(o_ref.dtype)


def _build_minv_operator(d_moments, a, group, dtype):
    """W' of shape (g*n*a, g*n*a) s.t. Minv(p) grouped g rows at a time == xg @ W'."""
    d_moments = d_moments.astype(jnp.float32)
    N, d1 = d_moments.shape
    inv_moments = jnp.exp(-d_moments)                                    # (N, d1)
    inv_mass = inv_moments[:, :1]                                        # (N, 1)
    padded = jnp.concatenate(
        [jnp.zeros_like(inv_mass), inv_moments[:, 1:]], axis=-1)         # (N, d1)
    # per-object (d1, d1) block: A_obj[k, j] = inv_mass + padded[k] * delta_{kj}
    blocks = inv_mass[:, :, None] + padded[:, :, None] * jnp.eye(d1, dtype=jnp.float32)
    # block-diagonal A of shape (n, n), n = N*d1
    A = jnp.einsum('pq,pkj->pkqj', jnp.eye(N, dtype=jnp.float32), blocks)
    A = A.reshape(N * d1, N * d1)
    # out[b, i, c] = sum_j A[i, j] p[b, j, c]  <=>  out_flat = p_flat @ kron(A^T, I_a)
    W = jnp.kron(A.T, jnp.eye(a, dtype=jnp.float32))                     # (n*a, n*a)
    # g independent rows packed along the lane dim -> block-diagonal replication
    Wg = jnp.kron(jnp.eye(group, dtype=jnp.float32), W)                  # (g*n*a, g*n*a)
    return Wg.astype(dtype)


def _choose_block_groups(groups, bytes_per_group):
    """Groups per grid step: ~4 MiB payload per block, grid >= 2 when large."""
    target = max(8, (_TARGET_BLOCK_BYTES // max(1, bytes_per_group)) // 8 * 8)
    if groups > target:
        return target                                   # grid >= 2 automatically
    if groups >= 16 and groups * bytes_per_group >= 2 * 1024 * 1024:
        # Large single-block case: split in two so the second v7x core gets work.
        half = ((groups + 1) // 2 + 7) // 8 * 8
        return min(groups, half)
    return groups


def minv_reference(p, d_moments):
    """Pure-JAX transcription of the PyTorch CL.Minv, for verification/bypass."""
    *start, n, a = p.shape
    N, d1 = d_moments.shape
    p_r = p.reshape(*start, N, d1, a)
    inv_moments = jnp.exp(-d_moments)
    inv_masses = inv_moments[:, :1]
    padded = jnp.concatenate([0.0 * inv_masses, inv_moments[:, 1:]], axis=-1)
    inverse_massed_p = p_r.sum(-2, keepdims=True) * inv_masses[:, :, None]
    total = inverse_massed_p + p_r * padded[:, :, None]
    return total.reshape(*p.shape)


def minv(p, d_moments, *, block_groups=None, min_pallas_rows=_MIN_PALLAS_ROWS):
    """Pallas equivalent of CL.Minv. p has shape (*, n, a), n = N*(d+1)."""
    *start, n, a = p.shape
    N, d1 = d_moments.shape
    assert n == N * d1, "n_dof must equal N*(d+1)"
    rows = int(np.prod(start)) if start else 1
    na = n * a

    # Small-batch bypass: a kernel launch for a handful of rows is pure fixed
    # cost; let XLA fuse the tiny op into surrounding computation instead.
    if rows < min_pallas_rows:
        return minv_reference(p, d_moments)

    # Lane-dense grouping: pack g consecutive batch rows into one super row so
    # the minor (lane) dim is ~128 instead of na.
    g = max(1, 128 // na) if na < 128 else 1
    gna = g * na
    groups = (rows + g - 1) // g
    rows_padded = groups * g

    x = p.reshape(rows, na)                        # free: native memory order
    if rows_padded != rows:
        x = jnp.pad(x, ((0, rows_padded - rows), (0, 0)))
    xg = x.reshape(groups, gna)                    # free: contiguous regrouping

    is_bf16 = np.dtype(p.dtype) == np.dtype(jnp.bfloat16)
    w_dtype = jnp.bfloat16 if is_bf16 else jnp.float32
    w = _build_minv_operator(d_moments, a, g, w_dtype)   # built once per call

    lane_padded = ((gna + 127) // 128) * 128
    bytes_per_group = lane_padded * np.dtype(p.dtype).itemsize
    if block_groups is None:
        tb = _choose_block_groups(groups, bytes_per_group)
    else:
        tb = min(int(block_groups), groups)
    if tb < groups:
        tb = max(8, (tb // 8) * 8)                 # sublane alignment when tiled
    grid = ((groups + tb - 1) // tb,)

    out = pl.pallas_call(
        _minv_matmul_kernel,
        out_shape=jax.ShapeDtypeStruct((groups, gna), p.dtype),
        grid_spec=pltpu.PrefetchScalarGridSpec(
            num_scalar_prefetch=0,
            grid=grid,
            in_specs=[
                pl.BlockSpec((tb, gna), lambda i: (i, 0)),
                pl.BlockSpec((gna, gna), lambda i: (0, 0)),  # constant: DMA'd once
            ],
            out_specs=pl.BlockSpec((tb, gna), lambda i: (i, 0)),
        ),
        compiler_params=pltpu.CompilerParams(
            dimension_semantics=("parallel",),     # megacore sharding on v7x
            vmem_limit_bytes=_VMEM_LIMIT_BYTES,
        ),
    )(xg, w)

    out = out.reshape(rows_padded, na)
    if rows_padded != rows:
        out = out[:rows]
    return out.reshape(p.shape)


def cl_forward(t, z, d_moments, n_dof, dof_ndim):
    """CL.forward(t, z) -> dz/dt  (time-independent Lagrangian dynamics).

    z: (bs, 2 * n_dof * dof_ndim) flattened [x, v].
    """
    del t  # CL assumes a time-independent Hamiltonian
    bs = z.shape[0]
    xv = z.reshape(bs, 2, n_dof, dof_ndim)
    x, v = xv[:, 0], xv[:, 1]
    # TODO(synk): CL.V raises NotImplementedError (subclasses supply it); use a
    # harmonic stand-in V(x)=0.5*||x||^2 so dV/dx = x just to exercise Minv(-dV).
    dV = x
    f = minv(-dV, d_moments)                                   # (bs, n_dof, a)
    # TODO(synk): constraint projection via DPhi = rigid_DPhi(G, x, v) and the
    # lambda solve live in external modules (rigid_DPhi, ConstrainedLagrangianDynamics).
    return jnp.concatenate([v.reshape(bs, -1), f.reshape(bs, -1)], axis=-1)


if __name__ == "__main__":
    key = jax.random.PRNGKey(0)
    k1, k2, k3, k4, k5 = jax.random.split(key, 5)

    d = 2                 # dof_ndim (spatial dimension of each body)
    N = 3                 # number of rigid objects
    n_dof = N * (d + 1)   # len(G.nodes) = 9
    a = d

    # Parameter d_moments[str(d)]: shape (N, d+1), init 0.1 * randn (deterministic)
    d_moments = 0.1 * jax.random.normal(k1, (N, d + 1), dtype=jnp.float32)

    # 1) f32, single-block Pallas path (rows not a multiple of the lane group,
    #    so the pad/slice path is exercised too).
    p1 = jax.random.normal(k2, (2048, n_dof, a), dtype=jnp.float32)
    out1 = jax.block_until_ready(minv(p1, d_moments))
    np.testing.assert_allclose(np.asarray(out1),
                               np.asarray(minv_reference(p1, d_moments)),
                               rtol=1e-3, atol=1e-3)

    # 2) f32, multi-block pipelined/parallel grid with a ragged last block.
    p2 = jax.random.normal(k3, (4096, n_dof, a), dtype=jnp.float32)
    out2 = jax.block_until_ready(minv(p2, d_moments, block_groups=256))
    np.testing.assert_allclose(np.asarray(out2),
                               np.asarray(minv_reference(p2, d_moments)),
                               rtol=1e-3, atol=1e-3)

    # 3) bf16 I/O stays bf16 through the pallas_call boundary; native bf16xbf16
    #    MXU path with f32 accumulation.
    p3 = jax.random.normal(k4, (1024, n_dof, a), dtype=jnp.bfloat16)
    out3 = jax.block_until_ready(minv(p3, d_moments))
    assert out3.dtype == jnp.bfloat16
    ref3 = minv_reference(p3.astype(jnp.float32), d_moments)
    np.testing.assert_allclose(np.asarray(out3).astype(np.float32),
                               np.asarray(ref3), rtol=3e-2, atol=3e-2)

    # 4) Small-batch forward (dynamics): bs=4 takes the small-batch bypass
    #    (fused XLA path), mirroring CL.forward's structure.
    bs = 4
    z0 = jax.random.normal(k5, (bs, 2 * n_dof * a), dtype=jnp.float32)
    dz = jax.block_until_ready(cl_forward(jnp.zeros(()), z0, d_moments, n_dof, a))
    assert dz.shape == z0.shape

    print("KERNEL_OK")
</pallas_src>

<mosaic_0001>
module attributes {stable_mosaic.version = 11 : i64} {
  func.func @_minv_matmul_kernel(%arg0: i32, %arg1: memref<293x126xf32, #tpu.memory_space<vmem>>, %arg2: memref<126x126xf32, #tpu.memory_space<vmem>>, %arg3: memref<293x126xf32, #tpu.memory_space<vmem>>) attributes {dimension_semantics = [#tpu.dimension_semantics<parallel>], iteration_bounds = array<i64: 1>, scalar_prefetch = 0 : i64, scratch_operands = 0 : i64, tpu.core_type = #tpu.core_type<tc>, window_params = [{transform_indices = @transform_0, window_bounds = array<i64: 293, 126>}, {pipeline_mode = #tpu.pipeline_mode<synchronous>, transform_indices = @transform_1, window_bounds = array<i64: 126, 126>}, {transform_indices = @transform_2, window_bounds = array<i64: 293, 126>}]} {
    %c0 = arith.constant 0 : index
    %c0_0 = arith.constant 0 : index
    %0 = vector.load %arg1[%c0, %c0_0] : memref<293x126xf32, #tpu.memory_space<vmem>>, vector<293x126xf32>
    %c0_1 = arith.constant 0 : index
    %c0_2 = arith.constant 0 : index
    %1 = vector.load %arg2[%c0_1, %c0_2] : memref<126x126xf32, #tpu.memory_space<vmem>>, vector<126x126xf32>
    %cst = arith.constant dense<0.000000e+00> : vector<293x126xf32>
    %2 = tpu.matmul %0, %1, %cst {dimension_numbers = #tpu.dot_dimension_numbers<[1], [0], [0], [1], [0, 0, 1, 1], [], []>} : vector<293x126xf32>, vector<126x126xf32>, vector<293x126xf32> -> vector<293x126xf32>
    %c0_3 = arith.constant 0 : index
    %c0_4 = arith.constant 0 : index
    %3 = vector.load %arg3[%c0_3, %c0_4] : memref<293x126xf32, #tpu.memory_space<vmem>>, vector<293x126xf32>
    tpu.vector_store %arg3[%c0_3, %c0_4], %2 {strides = array<i32>} : memref<293x126xf32, #tpu.memory_space<vmem>>, vector<293x126xf32>,
    return
  }
  func.func @transform_0(%arg0: i32) -> (i32, i32) {
    %c0_i32 = arith.constant 0 : i32
    %c0_i32_0 = arith.constant 0 : i32
    return %arg0, %c0_i32 : i32, i32
  }
  func.func @transform_1(%arg0: i32) -> (i32, i32) {
    %c0_i32 = arith.constant 0 : i32
    %c0_i32_0 = arith.constant 0 : i32
    %c0_i32_1 = arith.constant 0 : i32
    return %c0_i32, %c0_i32_0 : i32, i32
  }
  func.func @transform_2(%arg0: i32) -> (i32, i32) {
    %c0_i32 = arith.constant 0 : i32
    %c0_i32_0 = arith.constant 0 : i32
    return %arg0, %c0_i32 : i32, i32
  }
}

</mosaic_0001>

<llo_original>
// kernel: tpu_custom_call.1
$region0: #{tpu_custom_call.1}
  #allocation0 [shape = 'u32[]', space=smem, size = 0x4, offset = 0x4, fixed_abs, tag = 'smem constant byte address 0x4 - core index']
  #allocation1 [shape = 'u32[144,128]{1,0:T(1,128)}', space=vmem, size = 0x12000, scoped, tag = 'internal scratch']
  %s0 = inlined_call_operand.hbm [shape: f32[293,126], index: 0, kind: input, shape index: {}]
  %s1 = inlined_call_operand.hbm [shape: f32[126,126], index: 1, kind: input, shape index: {}]
  %s2 = inlined_call_operand.hbm [shape: f32[293,126], index: 2, kind: output, shape index: {}]
  %s3 = sld [smem:[#allocation0]]
  $region26: #{tpu_custom_call.1} parent=0
    _
  %s5 = ssub.s32 1, %s3
  %s6 = scalar_select 0, %s5, %s3
  $region1: #{tpu_custom_call.1} parent=0
    #allocation2 [shape = 'u8[151552]{0}', space=vmem, size = 0x25000, scoped, tag = 'input window, operand 0, single buffered']
    #allocation3 [shape = 's32[1]{0}', space=sflag, size = 0x4, scoped, tag = 'scoped memory for tpu_custom_call.1']
    #allocation4 [shape = 's32[1]{0}', space=sflag, size = 0x4, scoped, tag = 'scoped memory for tpu_custom_call.1']
    #allocation5 [shape = 'u8[65536]{0}', space=vmem, size = 0x10000, scoped, tag = 'input window, operand 1, single buffered']
    #allocation6 [shape = 's32[1]{0}', space=sflag, size = 0x4, scoped, tag = 'scoped memory for tpu_custom_call.1']
    #allocation7 [shape = 'u8[151552]{0}', space=vmem, size = 0x25000, scoped, tag = 'output window, operand 0, single buffered']
    %7 = vsyncpa [#allocation3], 0
    %8 = vsyncpa [#allocation6], 0
    %9 = vsyncpa [#allocation4], 0
    // Predicated region
    $region2: #{tpu_custom_call.1} parent=1 // pred_check
      _
    $region3: #{tpu_custom_call.1} parent=1 // pred_check_branch
      %11 = sbr.rel (0) target = $region5
    $region4: #{tpu_custom_call.1} parent=1 // pred_region
      %s13 = ssub.s32 4736, 4736
      %14 = vsyncadd [#allocation3], %s13
      %s15 = sshll.u32 [#allocation2], 4
      %s16 = int_to_ptr.vmem [resolvable:$true] %s15
      %21 = dma.hbm_to_vmem [thread:$0]  %s0, 4736, %s16, [#allocation3], 128, 128, 8
    $region5: #{tpu_custom_call.1} parent=1 // pred_fallthru
      _
    // Predicated region
    $region6: #{tpu_custom_call.1} parent=1 // pred_check
      _
    $region7: #{tpu_custom_call.1} parent=1 // pred_check_branch
      %23 = sbr.rel (0) target = $region9
    $region8: #{tpu_custom_call.1} parent=1 // pred_region
      %s25 = ssub.s32 2048, 2048
      %26 = vsyncadd [#allocation6], %s25
      %s27 = sshll.u32 [#allocation5], 4
      %s28 = int_to_ptr.vmem [resolvable:$true] %s27
      %33 = dma.hbm_to_vmem [thread:$0]  %s1, 2048, %s28, [#allocation6], 128, 128, 8
    $region9: #{tpu_custom_call.1} parent=1 // pred_fallthru
      _
    // Predicated region
    $region10: #{tpu_custom_call.1} parent=1 // pred_check
      _
    $region11: #{tpu_custom_call.1} parent=1 // pred_check_branch
      %35 = sbr.rel (0) target = $region13
    $region12: #{tpu_custom_call.1} parent=1 // pred_region
      %36 = dma.done [#allocation3], 4736
    $region13: #{tpu_custom_call.1} parent=1 // pred_fallthru
      _
    // Predicated region
    $region14: #{tpu_custom_call.1} parent=1 // pred_check
      _
    $region15: #{tpu_custom_call.1} parent=1 // pred_check_branch
      %38 = sbr.rel (0) target = $region17
    $region16: #{tpu_custom_call.1} parent=1 // pred_region
      %39 = dma.done [#allocation6], 2048
    $region17: #{tpu_custom_call.1} parent=1 // pred_fallthru
      _
    %v40 = vld [vmem:[#allocation2] sm:$0xff]
    %v41 = vld [vmem:[#allocation2 + $0x8] sm:$0xff]
    %v42 = vld [vmem:[#allocation2 + $0x10] sm:$0xff]
    %v43 = vld [vmem:[#allocation2 + $0x18] sm:$0xff]
    %v44 = vld [vmem:[#allocation2 + $0x20] sm:$0xff]
    %v45 = vld [vmem:[#allocation2 + $0x28] sm:$0xff]
    %v46 = vld [vmem:[#allocation2 + $0x30] sm:$0xff]
    %v47 = vld [vmem:[#allocation2 + $0x38] sm:$0xff]
    %v48 = vld [vmem:[#allocation2 + $0x40] sm:$0xff]
    %v49 = vld [vmem:[#allocation2 + $0x48] sm:$0xff]
    %v50 = vld [vmem:[#allocation2 + $0x50] sm:$0xff]
    %v51 = vld [vmem:[#allocation2 + $0x58] sm:$0xff]
    %v52 = vld [vmem:[#allocation2 + $0x60] sm:$0xff]
    %v53 = vld [vmem:[#allocation2 + $0x68] sm:$0xff]
    %v54 = vld [vmem:[#allocation2 + $0x70] sm:$0xff]
    %v55 = vld [vmem:[#allocation2 + $0x78] sm:$0xff]
    %v56 = vld [vmem:[#allocation2 + $0x80] sm:$0xff]
    %v57 = vld [vmem:[#allocation2 + $0x88] sm:$0xff]
    %v58 = vld [vmem:[#allocation2 + $0x90] sm:$0xff]
    %v59 = vld [vmem:[#allocation2 + $0x98] sm:$0xff]
    %v60 = vld [vmem:[#allocation2 + $0xa0] sm:$0xff]
    %v61 = vld [vmem:[#allocation2 + $0xa8] sm:$0xff]
    %v62 = vld [vmem:[#allocation2 + $0xb0] sm:$0xff]
    %v63 = vld [vmem:[#allocation2 + $0xb8] sm:$0xff]
    %v64 = vld [vmem:[#allocation2 + $0xc0] sm:$0xff]
    %v65 = vld [vmem:[#allocation2 + $0xc8] sm:$0xff]
    %v66 = vld [vmem:[#allocation2 + $0xd0] sm:$0xff]
    %v67 = vld [vmem:[#allocation2 + $0xd8] sm:$0xff]
    %v68 = vld [vmem:[#allocation2 + $0xe0] sm:$0xff]
    %v69 = vld [vmem:[#allocation2 + $0xe8] sm:$0xff]
    %v70 = vld [vmem:[#allocation2 + $0xf0] sm:$0xff]
    %v71 = vld [vmem:[#allocation2 + $0xf8] sm:$0xff]
    %v72 = vld [vmem:[#allocation2 + $0x100] sm:$0xff]
    %v73 = vld [vmem:[#allocation2 + $0x108] sm:$0xff]
    %v74 = vld [vmem:[#allocation2 + $0x110] sm:$0xff]
    %v75 = vld [vmem:[#allocation2 + $0x118] sm:$0xff]
    %v76 = vld [vmem:[#allocation2 + $0x120] sm:$0x1f]
    %v77 = vld [vmem:[#allocation5] sm:$0xff]
    %v78 = vld [vmem:[#allocation5 + $0x8] sm:$0xff]
    %v79 = vld [vmem:[#allocation5 + $0x10] sm:$0xff]
    %v80 = vld [vmem:[#allocation5 + $0x18] sm:$0xff]
    %v81 = vld [vmem:[#allocation5 + $0x20] sm:$0xff]
    %v82 = vld [vmem:[#allocation5 + $0x28] sm:$0xff]
    %v83 = vld [vmem:[#allocation5 + $0x30] sm:$0xff]
    %v84 = vld [vmem:[#allocation5 + $0x38] sm:$0xff]
    %v85 = vld [vmem:[#allocation5 + $0x40] sm:$0xff]
    %v86 = vld [vmem:[#allocation5 + $0x48] sm:$0xff]
    %v87 = vld [vmem:[#allocation5 + $0x50] sm:$0xff]
    %v88 = vld [vmem:[#allocation5 + $0x58] sm:$0xff]
    %v89 = vld [vmem:[#allocation5 + $0x60] sm:$0xff]
    %v90 = vld [vmem:[#allocation5 + $0x68] sm:$0xff]
    %v91 = vld [vmem:[#allocation5 + $0x70] sm:$0xff]
    %v92 = vld [vmem:[#allocation5 + $0x78] sm:$0x3f]
    %vm93 = vcmask 1031168
    %v95 = vsel %vm93, %v40, 0
    %v98 = vsel %vm93, %v41, 0
    %v101 = vsel %vm93, %v42, 0
    %v104 = vsel %vm93, %v43, 0
    %v107 = vsel %vm93, %v44, 0
    %v110 = vsel %vm93, %v45, 0
    %v113 = vsel %vm93, %v46, 0
    %v116 = vsel %vm93, %v47, 0
    %v119 = vsel %vm93, %v48, 0
    %v122 = vsel %vm93, %v49, 0
    %v125 = vsel %vm93, %v50, 0
    %v128 = vsel %vm93, %v51, 0
    %v131 = vsel %vm93, %v52, 0
    %v134 = vsel %vm93, %v53, 0
    %v137 = vsel %vm93, %v54, 0
    %v140 = vsel %vm93, %v55, 0
    %v143 = vsel %vm93, %v56, 0
    %v146 = vsel %vm93, %v57, 0
    %v149 = vsel %vm93, %v58, 0
    %v152 = vsel %vm93, %v59, 0
    %v155 = vsel %vm93, %v60, 0
    %v158 = vsel %vm93, %v61, 0
    %v161 = vsel %vm93, %v62, 0
    %v164 = vsel %vm93, %v63, 0
    %v167 = vsel %vm93, %v64, 0
    %v170 = vsel %vm93, %v65, 0
    %v173 = vsel %vm93, %v66, 0
    %v176 = vsel %vm93, %v67, 0
    %v179 = vsel %vm93, %v68, 0
    %v182 = vsel %vm93, %v69, 0
    %v185 = vsel %vm93, %v70, 0
    %v188 = vsel %vm93, %v71, 0
    %v191 = vsel %vm93, %v72, 0
    %v194 = vsel %vm93, %v73, 0
    %v197 = vsel %vm93, %v74, 0
    %v200 = vsel %vm93, %v75, 0
    %v203 = vsel %vm93, %v76, 0
    %vm205 = vcmask 1045504
    %v207 = vsel %vm205, %v92, 0
    %209 = vmatprep.subr.mxu0 0.0
    %210 = vmatpush1.msra.mxu0 %v77
    %211 = vmatprep.subr.mxu0 0.0
    %212 = vmatpush1.msra.mxu0 %v78
    %213 = vmatprep.subr.mxu0 0.0
    %214 = vmatpush1.msra.mxu0 %v79
    %215 = vmatprep.subr.mxu0 0.0
    %216 = vmatpush1.msra.mxu0 %v80
    %217 = vmatprep.subr.mxu0 0.0
    %218 = vmatpush1.msra.mxu0 %v81
    %219 = vmatprep.subr.mxu0 0.0
    %220 = vmatpush1.msra.mxu0 %v82
    %221 = vmatprep.subr.mxu0 0.0
    %222 = vmatpush1.msra.mxu0 %v83
    %223 = vmatprep.subr.mxu0 0.0
    %224 = vmatpush1.msra.mxu0 %v84
    %225 = vmatprep.subr.mxu0 0.0
    %226 = vmatpush1.msra.mxu0 %v85
    %227 = vmatprep.subr.mxu0 0.0
    %228 = vmatpush1.msra.mxu0 %v86
    %229 = vmatprep.subr.mxu0 0.0
    %230 = vmatpush1.msra.mxu0 %v87
    %231 = vmatprep.subr.mxu0 0.0
    %232 = vmatpush1.msra.mxu0 %v88
    %233 = vmatprep.subr.mxu0 0.0
    %234 = vmatpush1.msra.mxu0 %v89
    %235 = vmatprep.subr.mxu0 0.0
    %236 = vmatpush1.msra.mxu0 %v90
    %237 = vmatprep.subr.mxu0 0.0
    %238 = vmatpush1.msra.mxu0 %v91
    %239 = vmatprep.subr.mxu0 0.0
    %240 = vmatpush1.msra.mxu0 %v207
    %241 = vmatprep.subr.mxu0 0.0
    %242 = vmatpush1.msra.mxu0 0.0
    %243 = vmatprep.subr.mxu0 0.0
    %244 = vmatpush1.msra.mxu0 0.0
    %245 = vmatprep.subr.mxu0 0.0
    %246 = vmatpush1.msra.mxu0 0.0
    %247 = vmatprep.subr.mxu0 0.0
    %248 = vmatpush1.msra.mxu0 0.0
    %249 = vmatprep.subr.mxu0 0.0
    %250 = vmatpush1.msra.mxu0 0.0
    %251 = vmatprep.subr.mxu0 0.0
    %252 = vmatpush1.msra.mxu0 0.0
    %253 = vmatprep.subr.mxu0 0.0
    %254 = vmatpush1.msra.mxu0 0.0
    %255 = vmatprep.subr.mxu0 0.0
    %256 = vmatpush1.msra.mxu0 0.0
    %257 = vmatprep.subr.mxu0 0.0
    %258 = vmatpush1.msra.mxu0 0.0
    %259 = vmatprep.subr.mxu0 0.0
    %260 = vmatpush1.msra.mxu0 0.0
    %261 = vmatprep.subr.mxu0 0.0
    %262 = vmatpush1.msra.mxu0 0.0
    %263 = vmatprep.subr.mxu0 0.0
    %264 = vmatpush1.msra.mxu0 0.0
    %265 = vmatprep.subr.mxu0 0.0
    %266 = vmatpush1.msra.mxu0 0.0
    %267 = vmatprep.subr.mxu0 0.0
    %268 = vmatpush1.msra.mxu0 0.0
    %269 = vmatprep.subr.mxu0 0.0
    %270 = vmatpush1.msra.mxu0 0.0
    %271 = vmatprep.subr.mxu0 0.0
    %272 = vmatpush1.msra.mxu0 0.0
    %273 = vmatprep.mubr.f32.mxu0 0.0
    %274 = vmatmul.mubr.f32.gmra.mrb[0].mxu0 %v95
    %v275 = vpop.f32.mrb[0].mxu0
    %v276 = vadd.f32 0.0, %v275
    %v277 = vpop.f32.mrb[0].mxu0
    %278 = vmatprep.mubr.f32.mxu0 0.0
    %279 = vmatmul.mubr.f32.gmra.mrb[0].mxu0 %v98
    %v280 = vpop.f32.mrb[0].mxu0
    %v281 = vadd.f32 0.0, %v280
    %v282 = vpop.f32.mrb[0].mxu0
    %283 = vmatprep.mubr.f32.mxu0 0.0
    %284 = vmatmul.mubr.f32.gmra.mrb[0].mxu0 %v101
    %v285 = vpop.f32.mrb[0].mxu0
    %v286 = vadd.f32 0.0, %v285
    %v287 = vpop.f32.mrb[0].mxu0
    %288 = vmatprep.mubr.f32.mxu0 0.0
    %289 = vmatmul.mubr.f32.gmra.mrb[0].mxu0 %v104
    %v290 = vpop.f32.mrb[0].mxu0
    %v291 = vadd.f32 0.0, %v290
    %v292 = vpop.f32.mrb[0].mxu0
    %293 = vmatprep.mubr.f32.mxu0 0.0
    %294 = vmatmul.mubr.f32.gmra.mrb[0].mxu0 %v107
    %v295 = vpop.f32.mrb[0].mxu0
    %v296 = vadd.f32 0.0, %v295
    %v297 = vpop.f32.mrb[0].mxu0
    %298 = vmatprep.mubr.f32.mxu0 0.0
    %299 = vmatmul.mubr.f32.gmra.mrb[0].mxu0 %v110
    %v300 = vpop.f32.mrb[0].mxu0
    %v301 = vadd.f32 0.0, %v300
    %v302 = vpop.f32.mrb[0].mxu0
    %303 = vmatprep.mubr.f32.mxu0 0.0
    %304 = vmatmul.mubr.f32.gmra.mrb[0].mxu0 %v113
    %v305 = vpop.f32.mrb[0].mxu0
    %v306 = vadd.f32 0.0, %v305
    %v307 = vpop.f32.mrb[0].mxu0
    %308 = vmatprep.mubr.f32.mxu0 0.0
    %309 = vmatmul.mubr.f32.gmra.mrb[0].mxu0 %v116
    %v310 = vpop.f32.mrb[0].mxu0
    %v311 = vadd.f32 0.0, %v310
    %v312 = vpop.f32.mrb[0].mxu0
    %313 = vmatprep.mubr.f32.mxu0 0.0
    %314 = vmatmul.mubr.f32.gmra.mrb[0].mxu0 %v119
    %v315 = vpop.f32.mrb[0].mxu0
    %v316 = vadd.f32 0.0, %v315
    %v317 = vpop.f32.mrb[0].mxu0
    %318 = vmatprep.mubr.f32.mxu0 0.0
    %319 = vmatmul.mubr.f32.gmra.mrb[0].mxu0 %v122
    %v320 = vpop.f32.mrb[0].mxu0
    %v321 = vadd.f32 0.0, %v320
    %v322 = vpop.f32.mrb[0].mxu0
    %323 = vmatprep.mubr.f32.mxu0 0.0
    %324 = vmatmul.mubr.f32.gmra.mrb[0].mxu0 %v125
    %v325 = vpop.f32.mrb[0].mxu0
    %v326 = vadd.f32 0.0, %v325
    %v327 = vpop.f32.mrb[0].mxu0
    %328 = vmatprep.mubr.f32.mxu0 0.0
    %329 = vmatmul.mubr.f32.gmra.mrb[0].mxu0 %v128
    %v330 = vpop.f32.mrb[0].mxu0
    %v331 = vadd.f32 0.0, %v330
    %v332 = vpop.f32.mrb[0].mxu0
    %333 = vmatprep.mubr.f32.mxu0 0.0
    %334 = vmatmul.mubr.f32.gmra.mrb[0].mxu0 %v131
    %v335 = vpop.f32.mrb[0].mxu0
    %v336 = vadd.f32 0.0, %v335
    %v337 = vpop.f32.mrb[0].mxu0
    %338 = vmatprep.mubr.f32.mxu0 0.0
    %339 = vmatmul.mubr.f32.gmra.mrb[0].mxu0 %v134
    %v340 = vpop.f32.mrb[0].mxu0
    %v341 = vadd.f32 0.0, %v340
    %v342 = vpop.f32.mrb[0].mxu0
    %343 = vmatprep.mubr.f32.mxu0 0.0
    %344 = vmatmul.mubr.f32.gmra.mrb[0].mxu0 %v137
    %v345 = vpop.f32.mrb[0].mxu0
    %v346 = vadd.f32 0.0, %v345
    %v347 = vpop.f32.mrb[0].mxu0
    %348 = vmatprep.mubr.f32.mxu0 0.0
    %349 = vmatmul.mubr.f32.gmra.mrb[0].mxu0 %v140
    %v350 = vpop.f32.mrb[0].mxu0
    %v351 = vadd.f32 0.0, %v350
    %v352 = vpop.f32.mrb[0].mxu0
    %353 = vmatprep.mubr.f32.mxu0 0.0
    %354 = vmatmul.mubr.f32.gmra.mrb[0].mxu0 %v143
    %v355 = vpop.f32.mrb[0].mxu0
    %v356 = vadd.f32 0.0, %v355
    %v357 = vpop.f32.mrb[0].mxu0
    %358 = vmatprep.mubr.f32.mxu0 0.0
    %359 = vmatmul.mubr.f32.gmra.mrb[0].mxu0 %v146
    %v360 = vpop.f32.mrb[0].mxu0
    %v361 = vadd.f32 0.0, %v360
    %v362 = vpop.f32.mrb[0].mxu0
    %363 = vmatprep.mubr.f32.mxu0 0.0
    %364 = vmatmul.mubr.f32.gmra.mrb[0].mxu0 %v149
    %v365 = vpop.f32.mrb[0].mxu0
    %v366 = vadd.f32 0.0, %v365
    %v367 = vpop.f32.mrb[0].mxu0
    %368 = vmatprep.mubr.f32.mxu0 0.0
    %369 = vmatmul.mubr.f32.gmra.mrb[0].mxu0 %v152
    %v370 = vpop.f32.mrb[0].mxu0
    %v371 = vadd.f32 0.0, %v370
    %v372 = vpop.f32.mrb[0].mxu0
    %373 = vmatprep.mubr.f32.mxu0 0.0
    %374 = vmatmul.mubr.f32.gmra.mrb[0].mxu0 %v155
    %v375 = vpop.f32.mrb[0].mxu0
    %v376 = vadd.f32 0.0, %v375
    %v377 = vpop.f32.mrb[0].mxu0
    %378 = vmatprep.mubr.f32.mxu0 0.0
    %379 = vmatmul.mubr.f32.gmra.mrb[0].mxu0 %v158
    %v380 = vpop.f32.mrb[0].mxu0
    %v381 = vadd.f32 0.0, %v380
    %v382 = vpop.f32.mrb[0].mxu0
    %383 = vmatprep.mubr.f32.mxu0 0.0
    %384 = vmatmul.mubr.f32.gmra.mrb[0].mxu0 %v161
    %v385 = vpop.f32.mrb[0].mxu0
    %v386 = vadd.f32 0.0, %v385
    %v387 = vpop.f32.mrb[0].mxu0
    %388 = vmatprep.mubr.f32.mxu0 0.0
    %389 = vmatmul.mubr.f32.gmra.mrb[0].mxu0 %v164
    %v390 = vpop.f32.mrb[0].mxu0
    %v391 = vadd.f32 0.0, %v390
    %v392 = vpop.f32.mrb[0].mxu0
    %393 = vmatprep.mubr.f32.mxu0 0.0
    %394 = vmatmul.mubr.f32.gmra.mrb[0].mxu0 %v167
    %v395 = vpop.f32.mrb[0].mxu0
    %v396 = vadd.f32 0.0, %v395
    %v397 = vpop.f32.mrb[0].mxu0
    %398 = vmatprep.mubr.f32.mxu0 0.0
    %399 = vmatmul.mubr.f32.gmra.mrb[0].mxu0 %v170
    %v400 = vpop.f32.mrb[0].mxu0
    %v401 = vadd.f32 0.0, %v400
    %v402 = vpop.f32.mrb[0].mxu0
    %403 = vmatprep.mubr.f32.mxu0 0.0
    %404 = vmatmul.mubr.f32.gmra.mrb[0].mxu0 %v173
    %v405 = vpop.f32.mrb[0].mxu0
    %v406 = vadd.f32 0.0, %v405
    %v407 = vpop.f32.mrb[0].mxu0
    %408 = vmatprep.mubr.f32.mxu0 0.0
    %409 = vmatmul.mubr.f32.gmra.mrb[0].mxu0 %v176
    %v410 = vpop.f32.mrb[0].mxu0
    %v411 = vadd.f32 0.0, %v410
    %v412 = vpop.f32.mrb[0].mxu0
    %413 = vmatprep.mubr.f32.mxu0 0.0
    %414 = vmatmul.mubr.f32.gmra.mrb[0].mxu0 %v179
    %v415 = vpop.f32.mrb[0].mxu0
    %v416 = vadd.f32 0.0, %v415
    %v417 = vpop.f32.mrb[0].mxu0
    %418 = vmatprep.mubr.f32.mxu0 0.0
    %419 = vmatmul.mubr.f32.gmra.mrb[0].mxu0 %v182
    %v420 = vpop.f32.mrb[0].mxu0
    %v421 = vadd.f32 0.0, %v420
    %v422 = vpop.f32.mrb[0].mxu0
    %423 = vmatprep.mubr.f32.mxu0 0.0
    %424 = vmatmul.mubr.f32.gmra.mrb[0].mxu0 %v185
    %v425 = vpop.f32.mrb[0].mxu0
    %v426 = vadd.f32 0.0, %v425
    %v427 = vpop.f32.mrb[0].mxu0
    %428 = vmatprep.mubr.f32.mxu0 0.0
    %429 = vmatmul.mubr.f32.gmra.mrb[0].mxu0 %v188
    %v430 = vpop.f32.mrb[0].mxu0
    %v431 = vadd.f32 0.0, %v430
    %v432 = vpop.f32.mrb[0].mxu0
    %433 = vmatprep.mubr.f32.mxu0 0.0
    %434 = vmatmul.mubr.f32.gmra.mrb[0].mxu0 %v191
    %v435 = vpop.f32.mrb[0].mxu0
    %v436 = vadd.f32 0.0, %v435
    %v437 = vpop.f32.mrb[0].mxu0
    %438 = vmatprep.mubr.f32.mxu0 0.0
    %439 = vmatmul.mubr.f32.gmra.mrb[0].mxu0 %v194
    %v440 = vpop.f32.mrb[0].mxu0
    %v441 = vadd.f32 0.0, %v440
    %v442 = vpop.f32.mrb[0].mxu0
    %443 = vmatprep.mubr.f32.mxu0 0.0
    %444 = vmatmul.mubr.f32.gmra.mrb[0].mxu0 %v197
    %v445 = vpop.f32.mrb[0].mxu0
    %v446 = vadd.f32 0.0, %v445
    %v447 = vpop.f32.mrb[0].mxu0
    %448 = vmatprep.mubr.f32.mxu0 0.0
    %449 = vmatmul.mubr.f32.gmra.mrb[0].mxu0 %v200
    %v450 = vpop.f32.mrb[0].mxu0
    %v451 = vadd.f32 0.0, %v450
    %v452 = vpop.f32.mrb[0].mxu0
    %453 = vmatprep.mubr.f32.mxu0 0.0
    %454 = vmatmul.mubr.f32.gmra.mrb[0].mxu0 %v203
    %v455 = vpop.f32.mrb[0].mxu0
    %v456 = vadd.f32 0.0, %v455
    %v457 = vpop.f32.mrb[0].mxu0
    %458 = vdwg.mxu0
    %459 = vst.msk [vmem:[#allocation7] sm:$0xff] %vm93, %v276
    %460 = vst.msk [vmem:[#allocation7 + $0x8] sm:$0xff] %vm93, %v281
    %461 = vst.msk [vmem:[#allocation7 + $0x10] sm:$0xff] %vm93, %v286
    %462 = vst.msk [vmem:[#allocation7 + $0x18] sm:$0xff] %vm93, %v291
    %463 = vst.msk [vmem:[#allocation7 + $0x20] sm:$0xff] %vm93, %v296
    %464 = vst.msk [vmem:[#allocation7 + $0x28] sm:$0xff] %vm93, %v301
    %465 = vst.msk [vmem:[#allocation7 + $0x30] sm:$0xff] %vm93, %v306
    %466 = vst.msk [vmem:[#allocation7 + $0x38] sm:$0xff] %vm93, %v311
    %467 = vst.msk [vmem:[#allocation7 + $0x40] sm:$0xff] %vm93, %v316
    %468 = vst.msk [vmem:[#allocation7 + $0x48] sm:$0xff] %vm93, %v321
    %469 = vst.msk [vmem:[#allocation7 + $0x50] sm:$0xff] %vm93, %v326
    %470 = vst.msk [vmem:[#allocation7 + $0x58] sm:$0xff] %vm93, %v331
    %471 = vst.msk [vmem:[#allocation7 + $0x60] sm:$0xff] %vm93, %v336
    %472 = vst.msk [vmem:[#allocation7 + $0x68] sm:$0xff] %vm93, %v341
    %473 = vst.msk [vmem:[#allocation7 + $0x70] sm:$0xff] %vm93, %v346
    %474 = vst.msk [vmem:[#allocation7 + $0x78] sm:$0xff] %vm93, %v351
    %475 = vst.msk [vmem:[#allocation7 + $0x80] sm:$0xff] %vm93, %v356
    %476 = vst.msk [vmem:[#allocation7 + $0x88] sm:$0xff] %vm93, %v361
    %477 = vst.msk [vmem:[#allocation7 + $0x90] sm:$0xff] %vm93, %v366
    %478 = vst.msk [vmem:[#allocation7 + $0x98] sm:$0xff] %vm93, %v371
    %479 = vst.msk [vmem:[#allocation7 + $0xa0] sm:$0xff] %vm93, %v376
    %480 = vst.msk [vmem:[#allocation7 + $0xa8] sm:$0xff] %vm93, %v381
    %481 = vst.msk [vmem:[#allocation7 + $0xb0] sm:$0xff] %vm93, %v386
    %482 = vst.msk [vmem:[#allocation7 + $0xb8] sm:$0xff] %vm93, %v391
    %483 = vst.msk [vmem:[#allocation7 + $0xc0] sm:$0xff] %vm93, %v396
    %484 = vst.msk [vmem:[#allocation7 + $0xc8] sm:$0xff] %vm93, %v401
    %485 = vst.msk [vmem:[#allocation7 + $0xd0] sm:$0xff] %vm93, %v406
    %486 = vst.msk [vmem:[#allocation7 + $0xd8] sm:$0xff] %vm93, %v411
    %487 = vst.msk [vmem:[#allocation7 + $0xe0] sm:$0xff] %vm93, %v416
    %488 = vst.msk [vmem:[#allocation7 + $0xe8] sm:$0xff] %vm93, %v421
    %489 = vst.msk [vmem:[#allocation7 + $0xf0] sm:$0xff] %vm93, %v426
    %490 = vst.msk [vmem:[#allocation7 + $0xf8] sm:$0xff] %vm93, %v431
    %491 = vst.msk [vmem:[#allocation7 + $0x100] sm:$0xff] %vm93, %v436
    %492 = vst.msk [vmem:[#allocation7 + $0x108] sm:$0xff] %vm93, %v441
    %493 = vst.msk [vmem:[#allocation7 + $0x110] sm:$0xff] %vm93, %v446
    %494 = vst.msk [vmem:[#allocation7 + $0x118] sm:$0xff] %vm93, %v451
    %vm495 = vcmask 1028096
    %496 = vst.msk [vmem:[#allocation7 + $0x120] sm:$0x1f] %vm495, %v456
    // Predicated region
    $region18: #{tpu_custom_call.1} parent=1 // pred_check
      _
    $region19: #{tpu_custom_call.1} parent=1 // pred_check_branch
      %498 = sbr.rel (0) target = $region21
    $region20: #{tpu_custom_call.1} parent=1 // pred_region
      %s500 = ssub.s32 4736, 4736
      %501 = vsyncadd [#allocation4], %s500
      %s502 = sshll.u32 [#allocation7], 4
      %s503 = int_to_ptr.vmem [resolvable:$true] %s502
      %508 = dma.vmem_to_hbm [thread:$0]  %s503, 4736, %s2, [#allocation4], 128, 128, 8
    $region21: #{tpu_custom_call.1} parent=1 // pred_fallthru
      _
    // Predicated region
    $region22: #{tpu_custom_call.1} parent=1 // pred_check
      _
    $region23: #{tpu_custom_call.1} parent=1 // pred_check_branch
      %510 = sbr.rel (0) target = $region25
    $region24: #{tpu_custom_call.1} parent=1 // pred_region
      %511 = dma.done [#allocation4], 4736
    $region25: #{tpu_custom_call.1} parent=1 // pred_fallthru
      _
    %512 = vsyncpa [#allocation3], 1
    %513 = vsyncpa [#allocation6], 1
    %514 = vsyncpa [#allocation4], 1

</llo_original>
